<compile_context>
chip_gen: v7x
topology: tpu7x:2x2x1
jax: 0.10.0
libtpu: 0.0.40
codegen_flags: <defaults>
</compile_context>

<pallas_src>
import functools

import jax
import jax.numpy as jnp
from jax.experimental import pallas as pl
from jax.experimental.pallas import tpu as pltpu


# ----------------------- fused (matmul + bias [+ swish]) kernel -----------------------
def _matmul_bias_act_kernel(x_ref, w_ref, b_ref, o_ref, acc_ref, *, activation):
    k = pl.program_id(2)

    @pl.when(k == 0)
    def _():
        acc_ref[...] = jnp.zeros_like(acc_ref)

    # bf16 x bf16 -> f32 accumulate on the MXU
    acc_ref[...] += jnp.dot(x_ref[...], w_ref[...],
                            preferred_element_type=jnp.float32)

    @pl.when(k == pl.num_programs(2) - 1)
    def _():
        y = acc_ref[...] + b_ref[...].astype(jnp.float32)
        if activation == "swish":
            y = y * (1.0 / (1.0 + jnp.exp(-y)))   # x * sigmoid(x), all f32 (VPU/EUP)
        o_ref[...] = y.astype(o_ref.dtype)


def _pick_tile(size, cap):
    """Largest power-of-two-ish tile <= cap that divides size (falls back to full dim)."""
    if size <= cap:
        return size
    t = cap
    while t > 1 and size % t != 0:
        t //= 2
    return t if size % t == 0 else size


def matmul_bias_act(x, w, b, *, activation=None, out_dtype=None,
                    tm_cap=256, tn_cap=256, tk_cap=512):
    """y = act(x @ w + b); x:(N,K), w:(K,Nout), b:(Nout,)."""
    N, K = x.shape
    Kw, Nout = w.shape
    assert K == Kw
    out_dtype = out_dtype or x.dtype

    tm = _pick_tile(N, tm_cap)
    tn = _pick_tile(Nout, tn_cap)
    tk = _pick_tile(K, tk_cap)
    grid = (N // tm, Nout // tn, K // tk)   # reduction axis last

    kernel = functools.partial(_matmul_bias_act_kernel, activation=activation)

    return pl.pallas_call(
        kernel,
        out_shape=jax.ShapeDtypeStruct((N, Nout), out_dtype),
        grid_spec=pltpu.PrefetchScalarGridSpec(
            num_scalar_prefetch=0,
            grid=grid,
            in_specs=[
                pl.BlockSpec((tm, tk), lambda i, j, k: (i, k)),   # LHS tile
                pl.BlockSpec((tk, tn), lambda i, j, k: (k, j)),   # RHS tile
                pl.BlockSpec((1, tn), lambda i, j, k: (0, j)),    # bias column tile
            ],
            out_specs=pl.BlockSpec((tm, tn), lambda i, j, k: (i, j)),
            scratch_shapes=[pltpu.VMEM((tm, tn), jnp.float32)],
        ),
        compiler_params=pltpu.CompilerParams(
            dimension_semantics=("parallel", "parallel", "arbitrary"),
            vmem_limit_bytes=32 * 1024 * 1024,
        ),
    )(x, w, b.reshape(1, Nout))


# ------------------------------------ FeedForward -------------------------------------
class FeedForwardPallas:
    def __init__(self, dim, mult=4, dropout=0.0, *, key):
        self.dim = dim
        self.hidden = dim * mult
        self.dropout = dropout  # identity at inference
        k1, k2, k3, k4 = jax.random.split(key, 4)
        bound1 = 1.0 / (dim ** 0.5)
        bound2 = 1.0 / (self.hidden ** 0.5)
        # torch nn.Linear-style init, stored f32
        self.w1 = jax.random.uniform(k1, (dim, self.hidden), jnp.float32, -bound1, bound1)
        self.b1 = jax.random.uniform(k2, (self.hidden,), jnp.float32, -bound1, bound1)
        self.w2 = jax.random.uniform(k3, (self.hidden, dim), jnp.float32, -bound2, bound2)
        self.b2 = jax.random.uniform(k4, (dim,), jnp.float32, -bound2, bound2)

    def __call__(self, x):
        B, S, D = x.shape
        assert D == self.dim
        x2d = x.reshape(B * S, D)

        # bf16 on the MXU / over HBM, f32 accumulation and f32 bias+activation math.
        xb = x2d.astype(jnp.bfloat16)
        w1b = self.w1.astype(jnp.bfloat16)
        w2b = self.w2.astype(jnp.bfloat16)

        # Linear1 + Swish fused in one kernel; hidden kept bf16 (halves HBM traffic).
        h = matmul_bias_act(xb, w1b, self.b1, activation="swish",
                            out_dtype=jnp.bfloat16)
        # (Dropout: identity at inference.)
        out = matmul_bias_act(h, w2b, self.b2, activation=None,
                              out_dtype=x.dtype)
        return out.reshape(B, S, D)


if __name__ == "__main__":
    key = jax.random.PRNGKey(0)
    kx, kp = jax.random.split(key, 2)

    # Small but lane-aligned shapes: dim=128 (multiple of 128), hidden=512.
    B, S, D, MULT = 2, 8, 128, 4
    x = jax.random.normal(kx, (B, S, D), jnp.float32)

    ff = FeedForwardPallas(D, mult=MULT, dropout=0.0, key=kp)
    out = ff(x)
    jax.block_until_ready(out)

    # Reference (plain JAX) with matching bf16 rounding of the MXU inputs.
    N = B * S
    x32 = x.reshape(N, D).astype(jnp.bfloat16).astype(jnp.float32)
    w1_32 = ff.w1.astype(jnp.bfloat16).astype(jnp.float32)
    w2_32 = ff.w2.astype(jnp.bfloat16).astype(jnp.float32)
    h_ref = x32 @ w1_32 + ff.b1
    h_ref = h_ref * (1.0 / (1.0 + jnp.exp(-h_ref)))
    h_ref = h_ref.astype(jnp.bfloat16).astype(jnp.float32)   # hidden stored bf16 in kernel path
    ref = (h_ref @ w2_32 + ff.b2).reshape(B, S, D)

    assert out.shape == (B, S, D)
    assert jnp.allclose(out, ref, atol=1e-2, rtol=1e-2), "mismatch vs reference"

    print("KERNEL_OK")
</pallas_src>

<mosaic_0001>
module attributes {stable_mosaic.version = 11 : i64} {
  func.func @_matmul_bias_act_kernel(%arg0: i32, %arg1: i32, %arg2: i32, %arg3: memref<16x128xbf16, #tpu.memory_space<vmem>>, %arg4: memref<128x256xbf16, #tpu.memory_space<vmem>>, %arg5: memref<1x256xf32, #tpu.memory_space<vmem>>, %arg6: memref<16x256xbf16, #tpu.memory_space<vmem>>, %arg7: memref<16x256xf32, #tpu.memory_space<vmem>>) attributes {dimension_semantics = [#tpu.dimension_semantics<parallel>, #tpu.dimension_semantics<parallel>, #tpu.dimension_semantics<arbitrary>], iteration_bounds = array<i64: 1, 2, 1>, scalar_prefetch = 0 : i64, scratch_operands = 1 : i64, tpu.core_type = #tpu.core_type<tc>, window_params = [{transform_indices = @transform_0, window_bounds = array<i64: 16, 128>}, {transform_indices = @transform_1, window_bounds = array<i64: 128, 256>}, {transform_indices = @transform_2, window_bounds = array<i64: 1, 256>}, {transform_indices = @transform_3, window_bounds = array<i64: 16, 256>}]} {
    %c0_i32 = arith.constant 0 : i32
    %0 = arith.cmpi eq, %arg2, %c0_i32 : i32
    %1 = arith.extui %0 : i1 to i32
    %c0_i32_0 = arith.constant 0 : i32
    %2 = arith.cmpi ne, %1, %c0_i32_0 : i32
    scf.if %2 {
      %cst_10 = arith.constant 0.000000e+00 : f32
      %12 = vector.broadcast %cst_10 : f32 to vector<16x256xf32>
      %c0_11 = arith.constant 0 : index
      %c0_12 = arith.constant 0 : index
      %13 = vector.load %arg7[%c0_11, %c0_12] : memref<16x256xf32, #tpu.memory_space<vmem>>, vector<16x256xf32>
      tpu.vector_store %arg7[%c0_11, %c0_12], %12 {strides = array<i32>} : memref<16x256xf32, #tpu.memory_space<vmem>>, vector<16x256xf32>,
    } else {
    }
    %c0 = arith.constant 0 : index
    %c0_1 = arith.constant 0 : index
    %3 = vector.load %arg7[%c0, %c0_1] : memref<16x256xf32, #tpu.memory_space<vmem>>, vector<16x256xf32>
    %c0_2 = arith.constant 0 : index
    %c0_3 = arith.constant 0 : index
    %4 = vector.load %arg3[%c0_2, %c0_3] : memref<16x128xbf16, #tpu.memory_space<vmem>>, vector<16x128xbf16>
    %c0_4 = arith.constant 0 : index
    %c0_5 = arith.constant 0 : index
    %5 = vector.load %arg4[%c0_4, %c0_5] : memref<128x256xbf16, #tpu.memory_space<vmem>>, vector<128x256xbf16>
    %cst = arith.constant dense<0.000000e+00> : vector<16x256xf32>
    %6 = tpu.matmul %4, %5, %cst {dimension_numbers = #tpu.dot_dimension_numbers<[1], [0], [0], [1], [0, 0, 1, 1], [], []>} : vector<16x128xbf16>, vector<128x256xbf16>, vector<16x256xf32> -> vector<16x256xf32>
    %7 = arith.addf %3, %6 : vector<16x256xf32>
    %c0_6 = arith.constant 0 : index
    %c0_7 = arith.constant 0 : index
    %8 = vector.load %arg7[%c0_6, %c0_7] : memref<16x256xf32, #tpu.memory_space<vmem>>, vector<16x256xf32>
    tpu.vector_store %arg7[%c0_6, %c0_7], %7 {strides = array<i32>} : memref<16x256xf32, #tpu.memory_space<vmem>>, vector<16x256xf32>,
    %c0_i32_8 = arith.constant 0 : i32
    %9 = arith.cmpi eq, %arg2, %c0_i32_8 : i32
    %10 = arith.extui %9 : i1 to i32
    %c0_i32_9 = arith.constant 0 : i32
    %11 = arith.cmpi ne, %10, %c0_i32_9 : i32
    scf.if %11 {
      %c0_10 = arith.constant 0 : index
      %c0_11 = arith.constant 0 : index
      %12 = vector.load %arg7[%c0_10, %c0_11] : memref<16x256xf32, #tpu.memory_space<vmem>>, vector<16x256xf32>
      %c0_12 = arith.constant 0 : index
      %c0_13 = arith.constant 0 : index
      %13 = vector.load %arg5[%c0_12, %c0_13] : memref<1x256xf32, #tpu.memory_space<vmem>>, vector<1x256xf32>
      %14 = vector.broadcast %13 : vector<1x256xf32> to vector<16x256xf32>
      %15 = arith.addf %12, %14 : vector<16x256xf32>
      %cst_14 = arith.constant 0.000000e+00 : f32
      %16 = vector.broadcast %cst_14 : f32 to vector<16x256xf32>
      %17 = arith.subf %16, %15 : vector<16x256xf32>
      %18 = math.exp %17 : vector<16x256xf32>
      %cst_15 = arith.constant 1.000000e+00 : f32
      %19 = vector.broadcast %cst_15 : f32 to vector<16x256xf32>
      %20 = arith.addf %19, %18 : vector<16x256xf32>
      %cst_16 = arith.constant 1.000000e+00 : f32
      %21 = vector.broadcast %cst_16 : f32 to vector<16x256xf32>
      %22 = arith.divf %21, %20 : vector<16x256xf32>
      %23 = arith.mulf %15, %22 : vector<16x256xf32>
      %24 = arith.truncf %23 : vector<16x256xf32> to vector<16x256xbf16>
      %c0_17 = arith.constant 0 : index
      %c0_18 = arith.constant 0 : index
      %25 = vector.load %arg6[%c0_17, %c0_18] : memref<16x256xbf16, #tpu.memory_space<vmem>>, vector<16x256xbf16>
      tpu.vector_store %arg6[%c0_17, %c0_18], %24 {strides = array<i32>} : memref<16x256xbf16, #tpu.memory_space<vmem>>, vector<16x256xbf16>,
    } else {
    }
    return
  }
  func.func @transform_0(%arg0: i32, %arg1: i32, %arg2: i32) -> (i32, i32) {
    %c0_i32 = arith.constant 0 : i32
    return %arg0, %arg2 : i32, i32
  }
  func.func @transform_1(%arg0: i32, %arg1: i32, %arg2: i32) -> (i32, i32) {
    %c0_i32 = arith.constant 0 : i32
    return %arg2, %arg1 : i32, i32
  }
  func.func @transform_2(%arg0: i32, %arg1: i32, %arg2: i32) -> (i32, i32) {
    %c0_i32 = arith.constant 0 : i32
    %c0_i32_0 = arith.constant 0 : i32
    return %c0_i32, %arg1 : i32, i32
  }
  func.func @transform_3(%arg0: i32, %arg1: i32, %arg2: i32) -> (i32, i32) {
    %c0_i32 = arith.constant 0 : i32
    return %arg0, %arg1 : i32, i32
  }
}

</mosaic_0001>

<llo_original>
// kernel: tpu_custom_call.1
$region0: #{tpu_custom_call.1}
  #allocation0 [shape = 'u32[]', space=smem, size = 0x4, offset = 0x4, fixed_abs, tag = 'smem constant byte address 0x4 - core index']
  #allocation1 [shape = 'u32[144,128]{1,0:T(1,128)}', space=vmem, size = 0x12000, scoped, tag = 'internal scratch']
  #allocation2 [shape = 'f32[16,256]{1,0:T(8,128)}', space=vmem, size = 0x4000, scoped, tag = 'scratch operand']
  %s0 = inlined_call_operand.hbm [shape: bf16[16,128], index: 0, kind: input, shape index: {}]
  %s1 = inlined_call_operand.hbm [shape: bf16[128,512], index: 1, kind: input, shape index: {}]
  %s2 = inlined_call_operand.vmem [shape: f32[1,512], index: 2, kind: input, shape index: {}]
  %s3 = inlined_call_operand.hbm [shape: bf16[16,512], index: 3, kind: output, shape index: {}]
  %s4 = sld [smem:[#allocation0]]
  $region61: #{tpu_custom_call.1} parent=0
    _
  %s6 = ssub.s32 1, %s4
  %s7 = scalar_select 0, %s6, %s4
  $region1: #{tpu_custom_call.1} parent=0
    #allocation3 [shape = 'u8[4096]{0}', space=vmem, size = 0x1000, scoped, tag = 'input window, operand 0, single buffered']
    #allocation4 [shape = 's32[2]{0}', space=sflag, size = 0x8, scoped, tag = 'scoped memory for tpu_custom_call.1']
    #allocation5 [shape = 's32[2]{0}', space=sflag, size = 0x8, scoped, tag = 'scoped memory for tpu_custom_call.1']
    #allocation6 [shape = 'u8[131072]{0}', space=vmem, size = 0x20000, scoped, tag = 'input window, operand 1']
    #allocation7 [shape = 's32[2]{0}', space=sflag, size = 0x8, scoped, tag = 'scoped memory for tpu_custom_call.1']
    #allocation8 [shape = 'u8[16384]{0}', space=vmem, size = 0x4000, scoped, tag = 'output window, operand 0']
    %8 = vsyncpa [#allocation4], 0
    %9 = vsyncpa [#allocation7], 0
    %s10 = scalar_lea.sflag [#allocation7], 1
    %11 = vsyncpa %s10, 0
    %12 = vsyncpa [#allocation5], 0
    %s13 = scalar_lea.sflag [#allocation5], 1
    %14 = vsyncpa %s13, 0
    loop: start=0, step=1, limit=4
    $region2: #{tpu_custom_call.1} parent=1 // loop_pre_header
      _
    $region3: #{tpu_custom_call.1} parent=1 // loop_header
      %s16 = sphi 0, %s20
      %p17 = scmp.ge.s32.totalorder %s16, 4
      %s23 = sphi 0, %s42
      %s24 = sphi 0, %s38
      %s25 = sphi 0, %s34
      %s26 = sphi 0, %s23
      %s27 = sphi 0, %s24
      %s28 = sphi 0, %s25
      %s29 = sphi 0, %s26
      %s30 = sphi 0, %s27
      %s31 = sphi 0, %s28
      %s47 = sphi 0, %s49
      %s50 = sphi 0, %s47
      %s51 = sphi 0, %s50
      %s67 = sphi 0, %s51
      %s75 = sphi 0, %s77
      %s78 = sphi 0, %s75
      %s79 = sphi 0, %s78
      %s95 = sphi 0, %s79
      %s101 = sphi 0, %s103
      %s104 = sphi 0, %s101
      %s105 = sphi 0, %s104
      %s121 = sphi 0, %s105
      %s129 = sphi 0, %s131
      %s132 = sphi 0, %s129
      %s133 = sphi 0, %s132
      %s149 = sphi 0, %s133
    $region4: #{tpu_custom_call.1} parent=1 // loop_header_branch
      %19 = sbr.rel (%p17) target = $region8
    $region5: #{tpu_custom_call.1} parent=1 // loop_body
      %s21 = ssub.s32 %s16, 1
      %s22 = ssub.s32 %s16, 2
      %s32 = sadd.s32 1, %s25
      %p33 = scmp.ge.s32.totalorder %s32, 1
      %s34 = scalar_select %p33, 0, %s32
      %s35 = sadd.s32 1, %s24
      %s36 = scalar_select %p33, %s35, %s24
      %p37 = scmp.ge.s32.totalorder %s36, 2
      %s38 = scalar_select %p37, 0, %s36
      %s39 = sadd.s32 1, %s23
      %s40 = scalar_select %p37, %s39, %s23
      %p41 = scmp.ge.s32.totalorder %s40, 1
      %s42 = scalar_select %p41, 0, %s40
      %s43 = ssub.s32 %s23, %s42
      %s44 = ssub.s32 %s25, %s34
      %s45 = sor.u32 %s43, %s44
      %p46 = scmp.eq.s32.totalorder %s45, 0
      %s48 = sadd.s32 %s47, 1
      %s49 = scalar_select %p46, %s47, %s48
      %p52 = pneg %p46
      %p53 = scmp.eq.s32.totalorder %s16, 1
      %p54 = por %p52, %p53
      %p55 = scmp.ne.s32.totalorder %s47, %s50
      %p56 = scmp.eq.s32.totalorder %s16, 0
      %p57 = por %p55, %p56
      %p58 = scmp.ne.s32.totalorder %s47, %s50
      %p59 = scmp.eq.s32.totalorder %s21, 1
      %p60 = por %p58, %p59
      %p61 = scmp.ne.s32.totalorder %s50, %s51
      %p62 = scmp.eq.s32.totalorder %s21, 0
      %p63 = por %p61, %p62
      %p64 = scmp.ne.s32.totalorder %s50, %s51
      %p65 = scmp.eq.s32.totalorder %s22, 1
      %p66 = por %p64, %p65
      %p68 = scmp.ne.s32.totalorder %s51, %s67
      %p69 = scmp.eq.s32.totalorder %s22, 0
      %p70 = por %p68, %p69
      %s71 = ssub.s32 %s25, %s34
      %s72 = ssub.s32 %s24, %s38
      %s73 = sor.u32 %s71, %s72
      %p74 = scmp.eq.s32.totalorder %s73, 0
      %s76 = sadd.s32 %s75, 1
      %s77 = scalar_select %p74, %s75, %s76
      %p80 = pneg %p74
      %p81 = scmp.eq.s32.totalorder %s16, 1
      %p82 = por %p80, %p81
      %p83 = scmp.ne.s32.totalorder %s75, %s78
      %p84 = scmp.eq.s32.totalorder %s16, 0
      %p85 = por %p83, %p84
      %p86 = scmp.ne.s32.totalorder %s75, %s78
      %p87 = scmp.eq.s32.totalorder %s21, 1
      %p88 = por %p86, %p87
      %p89 = scmp.ne.s32.totalorder %s78, %s79
      %p90 = scmp.eq.s32.totalorder %s21, 0
      %p91 = por %p89, %p90
      %p92 = scmp.ne.s32.totalorder %s78, %s79
      %p93 = scmp.eq.s32.totalorder %s22, 1
      %p94 = por %p92, %p93
      %p96 = scmp.ne.s32.totalorder %s79, %s95
      %p97 = scmp.eq.s32.totalorder %s22, 0
      %p98 = por %p96, %p97
      %s99 = ssub.s32 %s24, %s38
      %p100 = scmp.eq.s32.totalorder %s99, 0
      %s102 = sadd.s32 %s101, 1
      %s103 = scalar_select %p100, %s101, %s102
      %p106 = pneg %p100
      %p107 = scmp.eq.s32.totalorder %s16, 1
      %p108 = por %p106, %p107
      %p109 = scmp.ne.s32.totalorder %s101, %s104
      %p110 = scmp.eq.s32.totalorder %s16, 0
      %p111 = por %p109, %p110
      %p112 = scmp.ne.s32.totalorder %s101, %s104
      %p113 = scmp.eq.s32.totalorder %s21, 1
      %p114 = por %p112, %p113
      %p115 = scmp.ne.s32.totalorder %s104, %s105
      %p116 = scmp.eq.s32.totalorder %s21, 0
      %p117 = por %p115, %p116
      %p118 = scmp.ne.s32.totalorder %s104, %s105
      %p119 = scmp.eq.s32.totalorder %s22, 1
      %p120 = por %p118, %p119
      %p122 = scmp.ne.s32.totalorder %s105, %s121
      %p123 = scmp.eq.s32.totalorder %s22, 0
      %p124 = por %p122, %p123
      %s125 = ssub.s32 %s23, %s42
      %s126 = ssub.s32 %s24, %s38
      %s127 = sor.u32 %s125, %s126
      %p128 = scmp.eq.s32.totalorder %s127, 0
      %s130 = sadd.s32 %s129, 1
      %s131 = scalar_select %p128, %s129, %s130
      %p134 = pneg %p128
      %p135 = scmp.eq.s32.totalorder %s16, 1
      %p136 = por %p134, %p135
      %p137 = scmp.ne.s32.totalorder %s129, %s132
      %p138 = scmp.eq.s32.totalorder %s16, 0
      %p139 = por %p137, %p138
      %p140 = scmp.ne.s32.totalorder %s129, %s132
      %p141 = scmp.eq.s32.totalorder %s21, 1
      %p142 = por %p140, %p141
      %p143 = scmp.ne.s32.totalorder %s132, %s133
      %p144 = scmp.eq.s32.totalorder %s21, 0
      %p145 = por %p143, %p144
      %p146 = scmp.ne.s32.totalorder %s132, %s133
      %p147 = scmp.eq.s32.totalorder %s22, 1
      %p148 = por %p146, %p147
      %p150 = scmp.ne.s32.totalorder %s133, %s149
      %p151 = scmp.eq.s32.totalorder %s22, 0
      %p152 = por %p150, %p151
      %p153 = scmp.le.s32.totalorder 1, %s16
      %p154 = scmp.lt.s32.totalorder %s16, 3
      %p155 = pnand %p153, %p154
      %p156 = pneg %p155
      // Predicated region
      $region9: #{tpu_custom_call.1} parent=5 // pred_check
        _
      $region10: #{tpu_custom_call.1} parent=5 // pred_check_branch
        %158 = sbr.rel (%p155) target = $region12
      $region11: #{tpu_custom_call.1} parent=5 // pred_region
        %s159 = ssub.s32 %s16, 1
        // Predicated region
        $region13: #{tpu_custom_call.1} parent=11 // pred_check
          %p160 = pneg %p63
        $region14: #{tpu_custom_call.1} parent=11 // pred_check_branch
          %162 = sbr.rel (%p160) target = $region16
        $region15: #{tpu_custom_call.1} parent=11 // pred_region
          %s163 = smul.u32 2, %s26
          %s165 = ssub.s32 128, 128
          %166 = vsyncadd [#allocation4], %s165
          %s167 = sadd.s32 %s28, %s163
          %s168 = smul.addr %s167, 64
          %s169 = scalar_lea.hbm %s0, %s168
          %s170 = sshll.u32 [#allocation3], 4
          %s171 = int_to_ptr.vmem [resolvable:$true] %s170
          %176 = dma.hbm_to_vmem [thread:$0]  %s169, 128, %s171, [#allocation4], 64, 64, 4
        $region16: #{tpu_custom_call.1} parent=11 // pred_fallthru
          _
      $region12: #{tpu_custom_call.1} parent=5 // pred_fallthru
        _
      %p177 = scmp.lt.s32.totalorder %s16, 2
      // Predicated region
      $region17: #{tpu_custom_call.1} parent=5 // pred_check
        %p178 = pneg %p177
      $region18: #{tpu_custom_call.1} parent=5 // pred_check_branch
        %180 = sbr.rel (%p178) target = $region20
      $region19: #{tpu_custom_call.1} parent=5 // pred_region
        // Predicated region
        $region21: #{tpu_custom_call.1} parent=19 // pred_check
          %p181 = pneg %p85
        $region22: #{tpu_custom_call.1} parent=19 // pred_check_branch
          %183 = sbr.rel (%p181) target = $region24
        $region23: #{tpu_custom_call.1} parent=19 // pred_region
          %s184 = sand.u32 %s75, 1
          %s185 = scalar_lea.sflag [#allocation7], %s184
          %s186 = sand.u32 %s75, 1
          %s187 = smul.addr %s186, 128
          %s188 = scalar_lea.vmem [#allocation6], %s187
          %s189 = smul.u32 16, %s25
          %s190 = smul.u32 2, %s24
          %s192 = ssub.s32 2048, 2048
          %193 = vsyncadd %s185, %s192
          %s194 = smul.addr %s189, 4
          %s195 = sadd.s32 %s190, %s194
          %s196 = smul.addr %s195, 64
          %s197 = scalar_lea.hbm %s1, %s196
          %s198 = sshll.u32 %s188, 4
          %s199 = int_to_ptr.vmem [resolvable:$true] %s198
          %204 = dma.hbm_to_vmem [thread:$0]  %s197, 2048, %s199, %s185, 256, 128, 8
        $region24: #{tpu_custom_call.1} parent=19 // pred_fallthru
          _
        // Predicated region
        $region25: #{tpu_custom_call.1} parent=19 // pred_check
          %p205 = pneg %p111
        $region26: #{tpu_custom_call.1} parent=19 // pred_check_branch
          %207 = sbr.rel (%p205) target = $region28
        $region27: #{tpu_custom_call.1} parent=19 // pred_region
          %s208 = smul.u32 2, %s24
          %p209 = scmp.lt.s32.totalorder %s208, 3
          %s210 = scalar_select %p209, %s208, 3
          %s211 = scalar_lea.vmem %s2, %s210
          %s212 = smul.u32 2, %s24
        $region28: #{tpu_custom_call.1} parent=19 // pred_fallthru
          _
      $region20: #{tpu_custom_call.1} parent=5 // pred_fallthru
        _
      %p213 = scmp.le.s32.totalorder 1, %s16
      %p214 = scmp.lt.s32.totalorder %s16, 3
      %p215 = pnand %p213, %p214
      %p216 = pneg %p215
      // Predicated region
      $region29: #{tpu_custom_call.1} parent=5 // pred_check
        _
      $region30: #{tpu_custom_call.1} parent=5 // pred_check_branch
        %218 = sbr.rel (%p215) target = $region32
      $region31: #{tpu_custom_call.1} parent=5 // pred_region
        %s219 = ssub.s32 %s16, 1
        // Predicated region
        $region33: #{tpu_custom_call.1} parent=31 // pred_check
          %p220 = pneg %p63
        $region34: #{tpu_custom_call.1} parent=31 // pred_check_branch
          %222 = sbr.rel (%p220) target = $region36
        $region35: #{tpu_custom_call.1} parent=31 // pred_region
          %223 = dma.done [#allocation4], 128
        $region36: #{tpu_custom_call.1} parent=31 // pred_fallthru
          _
        %s224 = sand.u32 %s78, 1
        %s225 = scalar_lea.sflag [#allocation7], %s224
        %s226 = sand.u32 %s78, 1
        %s227 = smul.addr %s226, 128
        %s228 = scalar_lea.vmem [#allocation6], %s227
        // Predicated region
        $region37: #{tpu_custom_call.1} parent=31 // pred_check
          %p229 = pneg %p91
        $region38: #{tpu_custom_call.1} parent=31 // pred_check_branch
          %231 = sbr.rel (%p229) target = $region40
        $region39: #{tpu_custom_call.1} parent=31 // pred_region
          %232 = dma.done %s225, 2048
        $region40: #{tpu_custom_call.1} parent=31 // pred_fallthru
          _
        %p233 = pneg %p63
        %p234 = pneg %p60
        %s235 = sand.u32 %s78, 1
        %s236 = scalar_lea.sflag [#allocation7], %s235
        %s237 = sand.u32 %s78, 1
        %s238 = smul.addr %s237, 128
        %s239 = scalar_lea.vmem [#allocation6], %s238
        %p240 = pneg %p91
        %p241 = pneg %p88
        %s242 = smul.u32 2, %s27
        %p243 = scmp.lt.s32.totalorder %s242, 3
        %s244 = scalar_select %p243, %s242, 3
        %s245 = scalar_lea.vmem %s2, %s244
        %p246 = pneg %p117
        %p247 = pneg %p114
        %p248 = pneg %p145
        %p249 = pneg %p142
        %s250 = sand.u32 %s132, 1
        %s251 = scalar_lea.sflag [#allocation5], %s250
        %s252 = sand.u32 %s132, 1
        %s253 = smul.addr %s252, 16
        %s254 = scalar_lea.vmem [#allocation8], %s253
        %s255 = smul.u32 2, %s26
        %s256 = smul.u32 16, %s28
        %s257 = smul.u32 2, %s27
        %s258 = smul.u32 2, %s27
        %p259 = scmp.lt.s32.totalorder %s258, 3
        %s260 = scalar_select %p259, %s258, 3
        %s261 = scalar_lea.vmem %s2, %s260
        %s262 = smul.u32 2, %s27
        %s263 = smul.u32 2, %s26
        %s264 = smul.u32 2, %s27
        %p266 = scmp.eq.s32.totalorder %s28, 0
        // Predicated region
        $region41: #{tpu_custom_call.1} parent=31 // pred_check
          %p267 = pneg %p266
        $region42: #{tpu_custom_call.1} parent=31 // pred_check_branch
          %269 = sbr.rel (%p267) target = $region44
        $region43: #{tpu_custom_call.1} parent=31 // pred_region
          %270 = vst [vmem:[#allocation2] sm:$0xff] 0.0
          %271 = vst [vmem:[#allocation2 + $0x8] sm:$0xff] 0.0
          %272 = vst [vmem:[#allocation2 + $0x10] sm:$0xff] 0.0
          %273 = vst [vmem:[#allocation2 + $0x18] sm:$0xff] 0.0
        $region44: #{tpu_custom_call.1} parent=31 // pred_fallthru
          _
        %v274 = vld [vmem:[#allocation2] sm:$0xff]
        %v275 = vld [vmem:[#allocation2 + $0x8] sm:$0xff]
        %v276 = vld [vmem:[#allocation2 + $0x10] sm:$0xff]
        %v277 = vld [vmem:[#allocation2 + $0x18] sm:$0xff]
        %v278 = vld [vmem:[#allocation3] sm:$0xf]
        %v279 = vld [vmem:[#allocation3 + $0x4] sm:$0xf]
        %v280 = vld [vmem:[%s228] sm:$0xff]
        %v281 = vld [vmem:[%s228 + $0x8] sm:$0xff]
        %v282 = vld [vmem:[%s228 + $0x10] sm:$0xff]
        %v283 = vld [vmem:[%s228 + $0x18] sm:$0xff]
        %v284 = vld [vmem:[%s228 + $0x20] sm:$0xff]
        %v285 = vld [vmem:[%s228 + $0x28] sm:$0xff]
        %v286 = vld [vmem:[%s228 + $0x30] sm:$0xff]
        %v287 = vld [vmem:[%s228 + $0x38] sm:$0xff]
        %v288 = vld [vmem:[%s228 + $0x40] sm:$0xff]
        %v289 = vld [vmem:[%s228 + $0x48] sm:$0xff]
        %v290 = vld [vmem:[%s228 + $0x50] sm:$0xff]
        %v291 = vld [vmem:[%s228 + $0x58] sm:$0xff]
        %v292 = vld [vmem:[%s228 + $0x60] sm:$0xff]
        %v293 = vld [vmem:[%s228 + $0x68] sm:$0xff]
        %v294 = vld [vmem:[%s228 + $0x70] sm:$0xff]
        %v295 = vld [vmem:[%s228 + $0x78] sm:$0xff]
        %v298 = vunpack.c.l.b16 %v278
        %v299 = vunpack.c.l.b16 %v279
        %v300 = vpack.c.b16 %v299, %v298
        %v318 = vunpack.c.l.b16 %v280
        %v319 = vunpack.c.h.b16 %v280
        %v320 = vunpack.c.l.b16 %v281
        %v321 = vunpack.c.h.b16 %v281
        %v322 = vunpack.c.l.b16 %v282
        %v323 = vunpack.c.h.b16 %v282
        %v324 = vunpack.c.l.b16 %v283
        %v325 = vunpack.c.h.b16 %v283
        %v326 = vunpack.c.l.b16 %v284
        %v327 = vunpack.c.h.b16 %v284
        %v328 = vunpack.c.l.b16 %v285
        %v329 = vunpack.c.h.b16 %v285
        %v330 = vunpack.c.l.b16 %v286
        %v331 = vunpack.c.h.b16 %v286
        %v332 = vunpack.c.l.b16 %v287
        %v333 = vunpack.c.h.b16 %v287
        %v334 = vunpack.c.l.b16 %v288
        %v335 = vunpack.c.h.b16 %v288
        %v336 = vunpack.c.l.b16 %v289
        %v337 = vunpack.c.h.b16 %v289
        %v338 = vunpack.c.l.b16 %v290
        %v339 = vunpack.c.h.b16 %v290
        %v340 = vunpack.c.l.b16 %v291
        %v341 = vunpack.c.h.b16 %v291
        %v342 = vunpack.c.l.b16 %v292
        %v343 = vunpack.c.h.b16 %v292
        %v344 = vunpack.c.l.b16 %v293
        %v345 = vunpack.c.h.b16 %v293
        %v346 = vunpack.c.l.b16 %v294
        %v347 = vunpack.c.h.b16 %v294
        %v348 = vunpack.c.l.b16 %v295
        %v349 = vunpack.c.h.b16 %v295
        %v350 = vpack.c.b16 %v320, %v318
        %v351 = vpack.c.b16 %v321, %v319
        %v352 = vpack.c.b16 %v324, %v322
        %v353 = vpack.c.b16 %v325, %v323
        %v354 = vpack.c.b16 %v328, %v326
        %v355 = vpack.c.b16 %v329, %v327
        %v356 = vpack.c.b16 %v332, %v330
        %v357 = vpack.c.b16 %v333, %v331
        %v358 = vpack.c.b16 %v336, %v334
        %v359 = vpack.c.b16 %v337, %v335
        %v360 = vpack.c.b16 %v340, %v338
        %v361 = vpack.c.b16 %v341, %v339
        %v362 = vpack.c.b16 %v344, %v342
        %v363 = vpack.c.b16 %v345, %v343
        %v364 = vpack.c.b16 %v348, %v346
        %v365 = vpack.c.b16 %v349, %v347
        %382 = vmatprep.subr.bf16.mxu0 %v351
        %383 = vmatpush1.bf16.msra.mxu0 %v350
        %384 = vmatprep.subr.bf16.mxu0 %v353
        %385 = vmatpush1.bf16.msra.mxu0 %v352
        %386 = vmatprep.subr.bf16.mxu0 %v355
        %387 = vmatpush1.bf16.msra.mxu0 %v354
        %388 = vmatprep.subr.bf16.mxu0 %v357
        %389 = vmatpush1.bf16.msra.mxu0 %v356
        %390 = vmatprep.subr.bf16.mxu0 %v359
        %391 = vmatpush1.bf16.msra.mxu0 %v358
        %392 = vmatprep.subr.bf16.mxu0 %v361
        %393 = vmatpush1.bf16.msra.mxu0 %v360
        %394 = vmatprep.subr.bf16.mxu0 %v363
        %395 = vmatpush1.bf16.msra.mxu0 %v362
        %396 = vmatprep.subr.bf16.mxu0 %v365
        %397 = vmatpush1.bf16.msra.mxu0 %v364
        %398 = vmatprep.subr.bf16.mxu0 0
        %399 = vmatpush1.bf16.msra.mxu0 0
        %400 = vmatprep.subr.bf16.mxu0 0
        %401 = vmatpush1.bf16.msra.mxu0 0
        %402 = vmatprep.subr.bf16.mxu0 0
        %403 = vmatpush1.bf16.msra.mxu0 0
        %404 = vmatprep.subr.bf16.mxu0 0
        %405 = vmatpush1.bf16.msra.mxu0 0
        %406 = vmatprep.subr.bf16.mxu0 0
        %407 = vmatpush1.bf16.msra.mxu0 0
        %408 = vmatprep.subr.bf16.mxu0 0
        %409 = vmatpush1.bf16.msra.mxu0 0
        %410 = vmatprep.subr.bf16.mxu0 0
        %411 = vmatpush1.bf16.msra.mxu0 0
        %412 = vmatprep.subr.bf16.mxu0 0
        %413 = vmatpush1.bf16.msra.mxu0 0
        %414 = vmatprep.mubr.bf16.mxu0 0
        %415 = vmatmul.mubr.bf16.gmra.mrb[0].mxu0 %v300
        %v416 = vpop.f32.mrb[0].mxu0
        %v417 = vadd.f32 0.0, %v416
        %v418 = vpop.f32.mrb[0].mxu0
        %v419 = vadd.f32 0.0, %v418
        %v420 = vpop.f32.mrb[0].mxu0
        %v421 = vadd.f32 0.0, %v420
        %v422 = vpop.f32.mrb[0].mxu0
        %v423 = vadd.f32 0.0, %v422
        %424 = vdwg.mxu0
        %v425 = vadd.f32 %v274, %v417
        %v426 = vadd.f32 %v275, %v419
        %v427 = vadd.f32 %v276, %v421
        %v428 = vadd.f32 %v277, %v423
        %429 = vst [vmem:[#allocation2] sm:$0xff] %v425
        %430 = vst [vmem:[#allocation2 + $0x8] sm:$0xff] %v426
        %431 = vst [vmem:[#allocation2 + $0x10] sm:$0xff] %v427
        %432 = vst [vmem:[#allocation2 + $0x18] sm:$0xff] %v428
        // Predicated region
        $region45: #{tpu_custom_call.1} parent=31 // pred_check
          %p433 = pneg %p266
        $region46: #{tpu_custom_call.1} parent=31 // pred_check_branch
          %435 = sbr.rel (%p433) target = $region48
        $region47: #{tpu_custom_call.1} parent=31 // pred_region
          %v436 = vld [vmem:[#allocation2] sm:$0xff]
          %v437 = vld [vmem:[#allocation2 + $0x8] sm:$0xff]
          %v438 = vld [vmem:[#allocation2 + $0x10] sm:$0xff]
          %v439 = vld [vmem:[#allocation2 + $0x18] sm:$0xff]
          %v440 = vld [vmem:[%s261] sm:$0x3]
          %v442 = vlaneseq
          %v443 = vshrl.u32 %v442, 7
          %v444 = vsub.s32 0, %v443
          %v445 = vrot.slane %v440, %v444
          %v446 = vlaneseq
          %v447 = vshrl.u32 %v446, 7
          %v448 = vsub.s32 1, %v447
          %v449 = vrot.slane %v440, %v448
          %v452 = vadd.f32 %v436, %v445
          %v453 = vadd.f32 %v437, %v449
          %v454 = vadd.f32 %v438, %v445
          %v455 = vadd.f32 %v439, %v449
          %v456 = vsub.f32 0.0, %v452
          %v457 = vsub.f32 0.0, %v453
          %v458 = vsub.f32 0.0, %v454
          %v459 = vsub.f32 0.0, %v455
          %v460 = vmul.f32 %v456, 1.442695
          %v461 = vpow.pop %v460
          %v462 = vmul.f32 %v457, 1.442695
          %v463 = vpow.pop %v462
          %v464 = vmul.f32 %v458, 1.442695
          %v465 = vpow.pop %v464
          %v466 = vmul.f32 %v459, 1.442695
          %v467 = vpow.pop %v466
          %v468 = vadd.f32 %v461, 1.0
          %v469 = vadd.f32 %v463, 1.0
          %v470 = vadd.f32 %v465, 1.0
          %v471 = vadd.f32 %v467, 1.0
          %v472 = vrcp.pop %v468
          %v473 = vmul.f32 1.0, %v472
          %v474 = vrcp.pop %v469
          %v475 = vmul.f32 1.0, %v474
          %v476 = vrcp.pop %v470
          %v477 = vmul.f32 1.0, %v476
          %v478 = vrcp.pop %v471
          %v479 = vmul.f32 1.0, %v478
          %v480 = vmul.f32 %v452, %v473
          %v481 = vmul.f32 %v453, %v475
          %v482 = vmul.f32 %v454, %v477
          %v483 = vmul.f32 %v455, %v479
          %v484 = vpack.c.bf16 %v482, %v480
          %v485 = vpack.c.bf16 %v483, %v481
          %v488 = vunpack.c.l.b16 %v484
          %v489 = vunpack.c.l.b16 %v485
          %v490 = vunpack.c.h.b16 %v484
          %v491 = vunpack.c.h.b16 %v485
          %v492 = vpack.c.b16 %v489, %v488
          %v493 = vpack.c.b16 %v491, %v490
          %496 = vst [vmem:[%s254] sm:$0xff] %v492
          %497 = vst [vmem:[%s254 + $0x8] sm:$0xff] %v493
        $region48: #{tpu_custom_call.1} parent=31 // pred_fallthru
          _
        %s498 = sand.u32 %s132, 1
        %s499 = scalar_lea.sflag [#allocation5], %s498
        %s500 = sand.u32 %s132, 1
        %s501 = smul.addr %s500, 16
        %s502 = scalar_lea.vmem [#allocation8], %s501
        // Predicated region
        $region49: #{tpu_custom_call.1} parent=31 // pred_check
          %p503 = pneg %p142
        $region50: #{tpu_custom_call.1} parent=31 // pred_check_branch
          %505 = sbr.rel (%p503) target = $region52
        $region51: #{tpu_custom_call.1} parent=31 // pred_region
          %s506 = smul.u32 2, %s26
          %s507 = smul.u32 2, %s27
          %s509 = ssub.s32 256, 256
          %510 = vsyncadd %s499, %s509
          %s511 = smul.addr %s506, 4
          %s512 = sadd.s32 %s507, %s511
          %s513 = smul.addr %s512, 64
          %s514 = scalar_lea.hbm %s3, %s513
          %s515 = sshll.u32 %s502, 4
          %s516 = int_to_ptr.vmem [resolvable:$true] %s515
          %521 = dma.vmem_to_hbm [thread:$0]  %s516, 256, %s514, %s499, 128, 256, 8
        $region52: #{tpu_custom_call.1} parent=31 // pred_fallthru
          _
      $region32: #{tpu_custom_call.1} parent=5 // pred_fallthru
        _
      %p522 = scmp.le.s32.totalorder 2, %s16
      // Predicated region
      $region53: #{tpu_custom_call.1} parent=5 // pred_check
        %p523 = pneg %p522
      $region54: #{tpu_custom_call.1} parent=5 // pred_check_branch
        %525 = sbr.rel (%p523) target = $region56
      $region55: #{tpu_custom_call.1} parent=5 // pred_region
        %s526 = ssub.s32 %s16, 2
        // Predicated region
        $region57: #{tpu_custom_call.1} parent=55 // pred_check
          %p527 = pneg %p148
        $region58: #{tpu_custom_call.1} parent=55 // pred_check_branch
          %529 = sbr.rel (%p527) target = $region60
        $region59: #{tpu_custom_call.1} parent=55 // pred_region
          %s530 = sand.u32 %s133, 1
          %s531 = scalar_lea.sflag [#allocation5], %s530
          %s532 = sand.u32 %s133, 1
          %s533 = smul.addr %s532, 16
          %s534 = scalar_lea.vmem [#allocation8], %s533
          %535 = dma.done %s531, 256
        $region60: #{tpu_custom_call.1} parent=55 // pred_fallthru
          _
      $region56: #{tpu_custom_call.1} parent=5 // pred_fallthru
        _
    $region6: #{tpu_custom_call.1} parent=1 // loop_footer
      %s20 = sadd.s32 1, %s16
    $region7: #{tpu_custom_call.1} parent=1 // loop_footer_branch
      %15 = sbr.rel target = $region3
    $region8: #{tpu_custom_call.1} parent=1 // loop_exit
      _
    %536 = vsyncpa [#allocation4], 1
    %s537 = scalar_lea.sflag [#allocation4], 1
    %538 = vsyncpa %s537, 1
    %539 = vsyncpa [#allocation7], 1
    %s540 = scalar_lea.sflag [#allocation7], 1
    %541 = vsyncpa %s540, 1
    %542 = vsyncpa [#allocation5], 1
    %s543 = scalar_lea.sflag [#allocation5], 1
    %544 = vsyncpa %s543, 1

</llo_original>
